<compile_context>
chip_gen: v5e
topology: v5e:2x2
jax: 0.10.0
libtpu: 0.0.40
codegen_flags: <defaults>
</compile_context>

<pallas_src>
import numpy as np
import jax
import jax.numpy as jnp
from jax import lax
from jax.experimental import pallas as pl
from jax.experimental.pallas import tpu as pltpu

LEAKY_SLOPE = 0.02
BN_EPS = 1e-5
_K, _S, _PAD = 3, 2, 1  # AvgPool2d(kernel_size=3, stride=2, padding=1)


def dummynet_features_kernel(x_ref, p_ref, out_ref):
    """features(x) as one VPU pass + one packed MXU matmul.

    x_ref:   (N*C, HW_PAD)      lane-dense view of the NCHW input
    p_ref:   (HW_PAD, OUT_PAD)  pooling matrix (carries BN scale and the 1/9
                                divisor; rows >= H*W and cols >= Hout*Wout are
                                zero padding)
    out_ref: (N*C, OUT_PAD)     lane-dense (128-multiple) pooled output
    """
    x = x_ref[...]
    # features[0]: LeakyReLU(0.02) — single VPU select/mul pass.
    y = jnp.where(x >= 0, x, LEAKY_SLOPE * x)
    # features[1]+[2]: BN scale and the 3x3/s2/p1 average pool are linear and
    # folded into P; batch is folded into the matmul M dimension.
    out_ref[...] = jnp.dot(
        y, p_ref[...], preferred_element_type=jnp.float32
    ).astype(out_ref.dtype)


def _window_matrix(size_in, size_out, k, s, pad):
    # M[r, o] = 1 if input index r falls inside the pooling window of output o.
    rows = np.arange(size_in)[:, None]
    starts = np.arange(size_out)[None, :] * s - pad
    return ((rows >= starts) & (rows < starts + k)).astype(np.float32)


def _pooling_matrix(H, W, Hout, Wout, hw_pad, out_pad):
    # BatchNorm2d eval-mode defaults (gamma=1, beta=0, mean=0, var=1):
    # per-channel affine collapses to a single scalar scale, bias = 0.
    bn_scale = 1.0 / np.sqrt(1.0 + BN_EPS)
    ph = _window_matrix(H, Hout, _K, _S, _PAD)            # (H, Hout)
    pw = _window_matrix(W, Wout, _K, _S, _PAD)            # (W, Wout)
    # P[h*W+w, oh*Wout+ow] = Ph[h,oh]*Pw[w,ow]; count_include_pad=True -> /9.
    p = np.kron(ph, pw) * (bn_scale / float(_K * _K))     # (H*W, Hout*Wout)
    p_pad = np.zeros((hw_pad, out_pad), np.float32)
    p_pad[: H * W, : Hout * Wout] = p
    return p_pad


def dummynet_features(x):
    """Pallas implementation of DummyNet.features(x) (NCHW float32)."""
    N, C, H, W = x.shape
    Hout = (H + 2 * _PAD - _K) // _S + 1
    Wout = (W + 2 * _PAD - _K) // _S + 1
    NC, HW, OUT = N * C, H * W, Hout * Wout
    # Lane-dense padding: K-dim (H*W) and the matmul N-dim both rounded up to
    # 128 -> unmasked lane-dense loads/stores, identical single-pass MXU cost.
    HW_PAD = ((HW + 127) // 128) * 128
    OUT_PAD = ((OUT + 127) // 128) * 128

    p = jnp.asarray(_pooling_matrix(H, W, Hout, Wout, HW_PAD, OUT_PAD))
    x2 = x.reshape(NC, HW)  # lane-dense 2-D view of the NCHW input
    if HW_PAD != HW:
        # Padded columns multiply zero rows of P -> no effect on the result.
        x2 = jnp.pad(x2, ((0, 0), (0, HW_PAD - HW)))

    # NOTE: grid=(1,) with block == full array is fine here (~0.4 MiB of VMEM
    # incl. double buffering).  If scaled to realistic N/H/W, add a leading
    # 'parallel' grid axis over N*C and tile H*W against vmem_limit_bytes
    # (v7x has only 64 MiB VMEM and 2 TensorCores to shard across).
    pooled = pl.pallas_call(
        dummynet_features_kernel,
        out_shape=jax.ShapeDtypeStruct((NC, OUT_PAD), x.dtype),
        grid_spec=pl.GridSpec(
            grid=(1,),
            in_specs=[
                pl.BlockSpec((NC, HW_PAD), lambda i: (0, 0)),
                pl.BlockSpec((HW_PAD, OUT_PAD), lambda i: (0, 0)),
            ],
            out_specs=pl.BlockSpec((NC, OUT_PAD), lambda i: (0, 0)),
        ),
        compiler_params=pltpu.CompilerParams(
            dimension_semantics=("arbitrary",),
            # forward() discards this result; keep the kernel alive under jit
            # (faithful to PyTorch actually executing the dead features pass).
            has_side_effects=True,
        ),
    )(x2, p)

    return pooled[:, :OUT].reshape(N, C, Hout, Wout)


def dummynet_forward(x):
    """DummyNet.forward: run features(x) (result discarded, exactly like the
    PyTorch dead `output.view(-1, 1).squeeze(1)`) and return x unchanged —
    no pass-through copy of x through HBM/VMEM."""
    _ = dummynet_features(x)
    return x


if __name__ == "__main__":
    key = jax.random.PRNGKey(0)
    # BatchNorm2d(3) fixes C=3; small spatial size.
    x = jax.random.normal(key, (2, 3, 16, 16), dtype=jnp.float32)

    # Run the Pallas features kernel and check it against a pure-JAX reference.
    feats = jax.block_until_ready(dummynet_features(x))
    y_ref = jnp.where(x >= 0, x, LEAKY_SLOPE * x) * (1.0 / np.sqrt(1.0 + BN_EPS))
    ref = lax.reduce_window(
        y_ref, 0.0, lax.add,
        window_dimensions=(1, 1, 3, 3),
        window_strides=(1, 1, 2, 2),
        padding=((0, 0), (0, 0), (1, 1), (1, 1)),
    ) / 9.0
    np.testing.assert_allclose(np.asarray(feats), np.asarray(ref),
                               rtol=1e-5, atol=1e-5)

    # forward() returns its input unchanged (no copy).
    out = jax.block_until_ready(dummynet_forward(x))
    np.testing.assert_array_equal(np.asarray(out), np.asarray(x))

    print("KERNEL_OK")
</pallas_src>

<mosaic_0001>
module attributes {stable_mosaic.version = 11 : i64} {
  func.func @dummynet_features_kernel(%arg0: i32, %arg1: memref<6x256xf32, #tpu.memory_space<vmem>>, %arg2: memref<256x128xf32, #tpu.memory_space<vmem>>, %arg3: memref<6x128xf32, #tpu.memory_space<vmem>>) attributes {dimension_semantics = [#tpu.dimension_semantics<arbitrary>], iteration_bounds = array<i64: 1>, scalar_prefetch = 0 : i64, scratch_operands = 0 : i64, tpu.core_type = #tpu.core_type<tc>, window_params = [{pipeline_mode = #tpu.pipeline_mode<synchronous>, transform_indices = @transform_0, window_bounds = array<i64: 6, 256>}, {pipeline_mode = #tpu.pipeline_mode<synchronous>, transform_indices = @transform_1, window_bounds = array<i64: 256, 128>}, {pipeline_mode = #tpu.pipeline_mode<synchronous>, transform_indices = @transform_2, window_bounds = array<i64: 6, 128>}]} {
    %c0 = arith.constant 0 : index
    %c0_0 = arith.constant 0 : index
    %0 = vector.load %arg1[%c0, %c0_0] : memref<6x256xf32, #tpu.memory_space<vmem>>, vector<6x256xf32>
    %cst = arith.constant 0.000000e+00 : f32
    %1 = vector.broadcast %cst : f32 to vector<6x256xf32>
    %2 = arith.cmpf oge, %0, %1 : vector<6x256xf32>
    %cst_1 = arith.constant 2.000000e-02 : f32
    %3 = vector.broadcast %cst_1 : f32 to vector<6x256xf32>
    %4 = arith.mulf %3, %0 : vector<6x256xf32>
    %5 = arith.select %2, %0, %4 : vector<6x256xi1>, vector<6x256xf32>
    %c0_2 = arith.constant 0 : index
    %c0_3 = arith.constant 0 : index
    %6 = vector.load %arg2[%c0_2, %c0_3] : memref<256x128xf32, #tpu.memory_space<vmem>>, vector<256x128xf32>
    %cst_4 = arith.constant dense<0.000000e+00> : vector<6x128xf32>
    %7 = tpu.matmul %5, %6, %cst_4 {dimension_numbers = #tpu.dot_dimension_numbers<[1], [0], [0], [1], [0, 0, 1, 1], [], []>} : vector<6x256xf32>, vector<256x128xf32>, vector<6x128xf32> -> vector<6x128xf32>
    %c0_5 = arith.constant 0 : index
    %c0_6 = arith.constant 0 : index
    %8 = vector.load %arg3[%c0_5, %c0_6] : memref<6x128xf32, #tpu.memory_space<vmem>>, vector<6x128xf32>
    tpu.vector_store %arg3[%c0_5, %c0_6], %7 {strides = array<i32>} : memref<6x128xf32, #tpu.memory_space<vmem>>, vector<6x128xf32>,
    return
  }
  func.func @transform_0(%arg0: i32) -> (i32, i32) {
    %c0_i32 = arith.constant 0 : i32
    %c0_i32_0 = arith.constant 0 : i32
    %c0_i32_1 = arith.constant 0 : i32
    return %c0_i32, %c0_i32_0 : i32, i32
  }
  func.func @transform_1(%arg0: i32) -> (i32, i32) {
    %c0_i32 = arith.constant 0 : i32
    %c0_i32_0 = arith.constant 0 : i32
    %c0_i32_1 = arith.constant 0 : i32
    return %c0_i32, %c0_i32_0 : i32, i32
  }
  func.func @transform_2(%arg0: i32) -> (i32, i32) {
    %c0_i32 = arith.constant 0 : i32
    %c0_i32_0 = arith.constant 0 : i32
    %c0_i32_1 = arith.constant 0 : i32
    return %c0_i32, %c0_i32_0 : i32, i32
  }
}

</mosaic_0001>

<llo_original>
// kernel: tpu_custom_call.1
$region0: #{tpu_custom_call.1}
  #allocation0 [shape = 'u32[]', space=smem, size = 0x4, offset = 0x4, fixed_abs, tag = 'smem constant byte address 0x4 - core index']
  #allocation1 [shape = 'u32[72,128]{1,0:T(1,128)}', space=vmem, size = 0x9000, scoped, tag = 'internal scratch']
  %s0 = inlined_call_operand.hbm [shape: f32[6,256], index: 0, kind: input, shape index: {}]
  %s1 = inlined_call_operand.hbm [shape: f32[256,128], index: 1, kind: input, shape index: {}]
  %s2 = inlined_call_operand.hbm [shape: f32[6,128], index: 2, kind: output, shape index: {}]
  %s3 = sld [smem:[#allocation0]]
  $region26: #{tpu_custom_call.1} parent=0
    _
  %s5 = ssub.s32 1, %s3
  %s6 = scalar_select 0, %s5, %s3
  $region1: #{tpu_custom_call.1} parent=0
    #allocation2 [shape = 'u8[8192]{0}', space=vmem, size = 0x2000, scoped, tag = 'input window, operand 0, single buffered']
    #allocation3 [shape = 's32[1]{0}', space=sflag, size = 0x4, scoped, tag = 'scoped memory for tpu_custom_call.1']
    #allocation4 [shape = 's32[1]{0}', space=sflag, size = 0x4, scoped, tag = 'scoped memory for tpu_custom_call.1']
    #allocation5 [shape = 'u8[131072]{0}', space=vmem, size = 0x20000, scoped, tag = 'input window, operand 1, single buffered']
    #allocation6 [shape = 's32[1]{0}', space=sflag, size = 0x4, scoped, tag = 'scoped memory for tpu_custom_call.1']
    #allocation7 [shape = 'u8[4096]{0}', space=vmem, size = 0x1000, scoped, tag = 'output window, operand 0, single buffered']
    %7 = vsyncpa [#allocation3], 0
    %8 = vsyncpa [#allocation6], 0
    %9 = vsyncpa [#allocation4], 0
    // Predicated region
    $region2: #{tpu_custom_call.1} parent=1 // pred_check
      _
    $region3: #{tpu_custom_call.1} parent=1 // pred_check_branch
      %11 = sbr.rel (0) target = $region5
    $region4: #{tpu_custom_call.1} parent=1 // pred_region
      %13 = vsyncadd [#allocation3], 0
      %s15 = sshll.u32 %s0, 4
      %s16 = int_to_ptr.hbm [resolvable:$true] %s15
      %s17 = sshll.u32 [#allocation2], 4
      %s18 = int_to_ptr.vmem [resolvable:$true] %s17
      %20 = dma.hbm_to_vmem [thread:$0]  %s16, 256, %s18, [#allocation3]
    $region5: #{tpu_custom_call.1} parent=1 // pred_fallthru
      _
    // Predicated region
    $region6: #{tpu_custom_call.1} parent=1 // pred_check
      _
    $region7: #{tpu_custom_call.1} parent=1 // pred_check_branch
      %22 = sbr.rel (0) target = $region9
    $region8: #{tpu_custom_call.1} parent=1 // pred_region
      %24 = vsyncadd [#allocation6], 0
      %s25 = sshll.u32 %s1, 4
      %s26 = int_to_ptr.hbm [resolvable:$true] %s25
      %s27 = sshll.u32 [#allocation5], 4
      %s28 = int_to_ptr.vmem [resolvable:$true] %s27
      %33 = dma.hbm_to_vmem [thread:$0]  %s26, 4096, %s28, [#allocation6], 128, 128, 8
    $region9: #{tpu_custom_call.1} parent=1 // pred_fallthru
      _
    // Predicated region
    $region10: #{tpu_custom_call.1} parent=1 // pred_check
      _
    $region11: #{tpu_custom_call.1} parent=1 // pred_check_branch
      %35 = sbr.rel (0) target = $region13
    $region12: #{tpu_custom_call.1} parent=1 // pred_region
      %37 = dma.done [#allocation3], 256
    $region13: #{tpu_custom_call.1} parent=1 // pred_fallthru
      _
    // Predicated region
    $region14: #{tpu_custom_call.1} parent=1 // pred_check
      _
    $region15: #{tpu_custom_call.1} parent=1 // pred_check_branch
      %39 = sbr.rel (0) target = $region17
    $region16: #{tpu_custom_call.1} parent=1 // pred_region
      %41 = dma.done [#allocation6], 4096
    $region17: #{tpu_custom_call.1} parent=1 // pred_fallthru
      _
    %v42 = vld [vmem:[#allocation2] sm:$0x3f]
    %v43 = vld [vmem:[#allocation2 + $0x8] sm:$0x3f]
    %vm44 = vcmp.ge.f32.partialorder %v42, 0.0
    %vm45 = vcmp.ge.f32.partialorder %v43, 0.0
    %v46 = vmul.f32 %v42, 0.02
    %v47 = vmul.f32 %v43, 0.02
    %v48 = vsel %vm44, %v42, %v46
    %v49 = vsel %vm45, %v43, %v47
    %v50 = vld [vmem:[#allocation5] sm:$0xff]
    %v51 = vld [vmem:[#allocation5 + $0x8] sm:$0xff]
    %v52 = vld [vmem:[#allocation5 + $0x10] sm:$0xff]
    %v53 = vld [vmem:[#allocation5 + $0x18] sm:$0xff]
    %v54 = vld [vmem:[#allocation5 + $0x20] sm:$0xff]
    %v55 = vld [vmem:[#allocation5 + $0x28] sm:$0xff]
    %v56 = vld [vmem:[#allocation5 + $0x30] sm:$0xff]
    %v57 = vld [vmem:[#allocation5 + $0x38] sm:$0xff]
    %v58 = vld [vmem:[#allocation5 + $0x40] sm:$0xff]
    %v59 = vld [vmem:[#allocation5 + $0x48] sm:$0xff]
    %v60 = vld [vmem:[#allocation5 + $0x50] sm:$0xff]
    %v61 = vld [vmem:[#allocation5 + $0x58] sm:$0xff]
    %v62 = vld [vmem:[#allocation5 + $0x60] sm:$0xff]
    %v63 = vld [vmem:[#allocation5 + $0x68] sm:$0xff]
    %v64 = vld [vmem:[#allocation5 + $0x70] sm:$0xff]
    %v65 = vld [vmem:[#allocation5 + $0x78] sm:$0xff]
    %v66 = vld [vmem:[#allocation5 + $0x80] sm:$0xff]
    %v67 = vld [vmem:[#allocation5 + $0x88] sm:$0xff]
    %v68 = vld [vmem:[#allocation5 + $0x90] sm:$0xff]
    %v69 = vld [vmem:[#allocation5 + $0x98] sm:$0xff]
    %v70 = vld [vmem:[#allocation5 + $0xa0] sm:$0xff]
    %v71 = vld [vmem:[#allocation5 + $0xa8] sm:$0xff]
    %v72 = vld [vmem:[#allocation5 + $0xb0] sm:$0xff]
    %v73 = vld [vmem:[#allocation5 + $0xb8] sm:$0xff]
    %v74 = vld [vmem:[#allocation5 + $0xc0] sm:$0xff]
    %v75 = vld [vmem:[#allocation5 + $0xc8] sm:$0xff]
    %v76 = vld [vmem:[#allocation5 + $0xd0] sm:$0xff]
    %v77 = vld [vmem:[#allocation5 + $0xd8] sm:$0xff]
    %v78 = vld [vmem:[#allocation5 + $0xe0] sm:$0xff]
    %v79 = vld [vmem:[#allocation5 + $0xe8] sm:$0xff]
    %v80 = vld [vmem:[#allocation5 + $0xf0] sm:$0xff]
    %v81 = vld [vmem:[#allocation5 + $0xf8] sm:$0xff]
    %82 = vmatpush.msra.mxu0 %v65
    %83 = vmatpush.msra.mxu0 %v64
    %84 = vmatpush.msra.mxu0 %v63
    %85 = vmatpush.msra.mxu0 %v62
    %86 = vmatpush.msra.mxu0 %v61
    %87 = vmatpush.msra.mxu0 %v60
    %88 = vmatpush.msra.mxu0 %v59
    %89 = vmatpush.msra.mxu0 %v58
    %90 = vmatpush.msra.mxu0 %v57
    %91 = vmatpush.msra.mxu0 %v56
    %92 = vmatpush.msra.mxu0 %v55
    %93 = vmatpush.msra.mxu0 %v54
    %94 = vmatpush.msra.mxu0 %v53
    %95 = vmatpush.msra.mxu0 %v52
    %96 = vmatpush.msra.mxu0 %v51
    %97 = vmatpush.msra.mxu0 %v50
    %98 = vmatmul.f32.gmra.mxu0 %v48
    %v99 = vpop.f32.mrf.mxu0
    %v100 = vadd.f32 0.0, %v99
    %101 = vdwg.mxu0
    %102 = vmatpush.msra.mxu0 %v81
    %103 = vmatpush.msra.mxu0 %v80
    %104 = vmatpush.msra.mxu0 %v79
    %105 = vmatpush.msra.mxu0 %v78
    %106 = vmatpush.msra.mxu0 %v77
    %107 = vmatpush.msra.mxu0 %v76
    %108 = vmatpush.msra.mxu0 %v75
    %109 = vmatpush.msra.mxu0 %v74
    %110 = vmatpush.msra.mxu0 %v73
    %111 = vmatpush.msra.mxu0 %v72
    %112 = vmatpush.msra.mxu0 %v71
    %113 = vmatpush.msra.mxu0 %v70
    %114 = vmatpush.msra.mxu0 %v69
    %115 = vmatpush.msra.mxu0 %v68
    %116 = vmatpush.msra.mxu0 %v67
    %117 = vmatpush.msra.mxu0 %v66
    %118 = vmatmul.f32.gmra.mxu0 %v49
    %v119 = vpop.f32.mrf.mxu0
    %v120 = vadd.f32 %v100, %v119
    %121 = vdwg.mxu0
    %122 = vst [vmem:[#allocation7] sm:$0x3f] %v120
    // Predicated region
    $region18: #{tpu_custom_call.1} parent=1 // pred_check
      _
    $region19: #{tpu_custom_call.1} parent=1 // pred_check_branch
      %124 = sbr.rel (0) target = $region21
    $region20: #{tpu_custom_call.1} parent=1 // pred_region
      %126 = vsyncadd [#allocation4], 0
      %s128 = sshll.u32 [#allocation7], 4
      %s129 = int_to_ptr.vmem [resolvable:$true] %s128
      %s130 = sshll.u32 %s2, 4
      %s131 = int_to_ptr.hbm [resolvable:$true] %s130
      %133 = dma.vmem_to_hbm [thread:$0]  %s129, 128, %s131, [#allocation4]
    $region21: #{tpu_custom_call.1} parent=1 // pred_fallthru
      _
    // Predicated region
    $region22: #{tpu_custom_call.1} parent=1 // pred_check
      _
    $region23: #{tpu_custom_call.1} parent=1 // pred_check_branch
      %135 = sbr.rel (0) target = $region25
    $region24: #{tpu_custom_call.1} parent=1 // pred_region
      %137 = dma.done [#allocation4], 128
    $region25: #{tpu_custom_call.1} parent=1 // pred_fallthru
      _
    %138 = vsyncpa [#allocation3], 1
    %139 = vsyncpa [#allocation6], 1
    %140 = vsyncpa [#allocation4], 1

</llo_original>
